<compile_context>
chip_gen: v7x
topology: tpu7x:2x2x1
jax: 0.10.0
libtpu: 0.0.40
codegen_flags: <defaults>
</compile_context>

<pallas_src>
import functools

import jax
import jax.numpy as jnp
from jax import lax
from jax.experimental import pallas as pl
from jax.experimental.pallas import tpu as pltpu

_LANES = 128
_SUBLANES = 8


def _rmse_partial_kernel(o_ref, l_ref, out_ref, *, rows_total, tile_rows, need_mask):
    """Per-grid-step partial sum of (o - l)^2, folded to one (8, 128) vreg tile."""
    step = pl.program_id(0)

    diff = o_ref[...].astype(jnp.float32) - l_ref[...].astype(jnp.float32)
    d2 = diff * diff

    def fold(x):
        # Pure VALU folds down to a single vreg-shaped partial; the (cheap, tiny)
        # cross-lane/sublane reduce is deferred to the wrapper.
        return x.reshape(tile_rows // _SUBLANES, _SUBLANES, _LANES).sum(axis=0)

    if need_mask:
        last = pl.num_programs(0) - 1

        # Interior steps: unmasked fast path.
        @pl.when(step != last)
        def _():
            out_ref[0] = fold(d2)

        # Final (partial) block: rows at/after `rows_total` hold unspecified data.
        @pl.when(step == last)
        def _():
            row_idx = (lax.broadcasted_iota(jnp.int32, (tile_rows, _LANES), 0)
                       + step * tile_rows)
            out_ref[0] = fold(jnp.where(row_idx < rows_total, d2, jnp.float32(0.0)))
    else:
        out_ref[0] = fold(d2)


def loss_rmse(outputs, label, *, tile_rows=8192):
    assert outputs.shape == label.shape
    n_elems = outputs.size
    assert n_elems > 0

    flat_o = jnp.ravel(outputs)
    flat_l = jnp.ravel(label)

    rem = n_elems % _LANES
    n_aligned = n_elems - rem
    rows_total = n_aligned // _LANES

    # Ragged (< 128-element) tail handled in plain JAX -- avoids the full-array
    # jnp.pad copy pass of the previous version.
    if rem:
        tail_o = flat_o[n_aligned:].astype(jnp.float32)
        tail_l = flat_l[n_aligned:].astype(jnp.float32)
        tail_sum = jnp.sum((tail_o - tail_l) ** 2)
    else:
        tail_sum = jnp.float32(0.0)

    if rows_total == 0:
        total = tail_sum
    else:
        if rem:
            o2 = flat_o[:n_aligned].reshape(rows_total, _LANES)
            l2 = flat_l[:n_aligned].reshape(rows_total, _LANES)
        else:
            # Free reshape: contiguous, no HBM copy.
            o2 = flat_o.reshape(rows_total, _LANES)
            l2 = flat_l.reshape(rows_total, _LANES)

        # Keep the native input dtype into the kernel (in-kernel .astype(f32)
        # handles precision). Sub-32-bit dtypes: respect the packed min tile
        # (e.g. (16,128) for bf16) and double the row tile for the same VMEM.
        itemsize = jnp.dtype(outputs.dtype).itemsize
        packing = max(1, 4 // itemsize)
        min_rows = _SUBLANES * packing
        tr_target = tile_rows * packing

        tr = min(tr_target, pl.cdiv(rows_total, min_rows) * min_rows)
        tr = max(min_rows, (tr // min_rows) * min_rows)
        grid_steps = pl.cdiv(rows_total, tr)
        need_mask = grid_steps * tr != rows_total

        in_bytes = itemsize + jnp.dtype(label.dtype).itemsize
        cost = pl.CostEstimate(
            flops=3 * n_elems,            # sub, mul, add per element
            transcendentals=0,            # sqrt happens in the wrapper
            bytes_accessed=n_elems * in_bytes
            + grid_steps * _SUBLANES * _LANES * 4,
        )

        kernel = functools.partial(
            _rmse_partial_kernel,
            rows_total=rows_total,
            tile_rows=tr,
            need_mask=need_mask,
        )

        # TODO(synk): optionally sweep pipeline_mode=pl.Buffered(3) on the input
        # BlockSpecs for v7x (only if it stays inside the VMEM budget).
        partials = pl.pallas_call(
            kernel,
            out_shape=jax.ShapeDtypeStruct((grid_steps, _SUBLANES, _LANES),
                                           jnp.float32),
            grid_spec=pltpu.PrefetchScalarGridSpec(
                num_scalar_prefetch=0,
                grid=(grid_steps,),
                in_specs=[
                    pl.BlockSpec((tr, _LANES), lambda i: (i, 0)),
                    pl.BlockSpec((tr, _LANES), lambda i: (i, 0)),
                ],
                out_specs=pl.BlockSpec((1, _SUBLANES, _LANES),
                                       lambda i: (i, 0, 0)),
            ),
            compiler_params=pltpu.CompilerParams(
                # Each step writes its own partial-sum block -> no carried state,
                # so the grid axis is fully 'parallel' (dual-TC sharding on v7x,
                # no-op on v5e/v6e).
                dimension_semantics=("parallel",),
                # 2 inputs x 2 buffers x 4 MiB blocks ~= 16 MiB; 40 MiB clears
                # v5e's 16 MiB scoped default with headroom on v7x's 64 MiB VMEM.
                vmem_limit_bytes=40 * 1024 * 1024,
            ),
            cost_estimate=cost,
        )(o2, l2)

        total = jnp.sum(partials) + tail_sum

    mean = total / jnp.float32(n_elems)
    return jnp.sqrt(mean + jnp.float32(1e-6))


if __name__ == "__main__":
    key = jax.random.PRNGKey(0)
    k1, k2 = jax.random.split(key)

    # Primary (128-aligned) check.
    shape = (2, 4, 16, 16)
    outputs = jax.random.normal(k1, shape, dtype=jnp.float32)
    label = jax.random.normal(k2, shape, dtype=jnp.float32)
    rmse = loss_rmse(outputs, label)
    jax.block_until_ready(rmse)
    ref = jnp.sqrt(jnp.mean((outputs - label) ** 2) + 1e-6)
    assert jnp.allclose(rmse, ref, rtol=1e-5, atol=1e-6), (rmse, ref)

    # Ragged / masked-edge-path check (numel not a multiple of 128).
    shape2 = (2, 4, 17, 17)
    o2 = jax.random.normal(k1, shape2, dtype=jnp.float32)
    l2 = jax.random.normal(k2, shape2, dtype=jnp.float32)
    rmse2 = loss_rmse(o2, l2)
    jax.block_until_ready(rmse2)
    ref2 = jnp.sqrt(jnp.mean((o2 - l2) ** 2) + 1e-6)
    assert jnp.allclose(rmse2, ref2, rtol=1e-5, atol=1e-6), (rmse2, ref2)

    print("KERNEL_OK")
</pallas_src>

<mosaic_0001>
module attributes {stable_mosaic.version = 11 : i64} {
  func.func @_rmse_partial_kernel(%arg0: i32, %arg1: memref<16x128xf32, #tpu.memory_space<vmem>>, %arg2: memref<16x128xf32, #tpu.memory_space<vmem>>, %arg3: memref<1x8x128xf32, #tpu.memory_space<vmem>>) attributes {dimension_semantics = [#tpu.dimension_semantics<parallel>], iteration_bounds = array<i64: 1>, scalar_prefetch = 0 : i64, scratch_operands = 0 : i64, tpu.core_type = #tpu.core_type<tc>, window_params = [{transform_indices = @transform_0, window_bounds = array<i64: 16, 128>}, {transform_indices = @transform_1, window_bounds = array<i64: 16, 128>}, {transform_indices = @transform_2, window_bounds = array<i64: 1, 8, 128>}]} {
    %c0 = arith.constant 0 : index
    %c0_0 = arith.constant 0 : index
    %0 = vector.load %arg1[%c0, %c0_0] : memref<16x128xf32, #tpu.memory_space<vmem>>, vector<16x128xf32>
    %c0_1 = arith.constant 0 : index
    %c0_2 = arith.constant 0 : index
    %1 = vector.load %arg2[%c0_1, %c0_2] : memref<16x128xf32, #tpu.memory_space<vmem>>, vector<16x128xf32>
    %2 = arith.subf %0, %1 : vector<16x128xf32>
    %3 = arith.mulf %2, %2 : vector<16x128xf32>
    %4 = vector.shape_cast %3 : vector<16x128xf32> to vector<2x8x128xf32>
    %cst = arith.constant dense<0.000000e+00> : vector<8x128xf32>
    %5 = vector.multi_reduction <add>, %4, %cst [0] : vector<2x8x128xf32> to vector<8x128xf32>
    %c0_3 = arith.constant 0 : index
    %c0_4 = arith.constant 0 : index
    %c0_5 = arith.constant 0 : index
    %6 = vector.load %arg3[%c0_3, %c0_4, %c0_5] : memref<1x8x128xf32, #tpu.memory_space<vmem>>, vector<1x8x128xf32>
    %7 = vector.shape_cast %6 : vector<1x8x128xf32> to vector<8x128xf32>
    %8 = vector.shape_cast %5 : vector<8x128xf32> to vector<1x8x128xf32>
    tpu.vector_store %arg3[%c0_3, %c0_4, %c0_5], %8 {strides = array<i32>} : memref<1x8x128xf32, #tpu.memory_space<vmem>>, vector<1x8x128xf32>,
    return
  }
  func.func @transform_0(%arg0: i32) -> (i32, i32) {
    %c0_i32 = arith.constant 0 : i32
    %c0_i32_0 = arith.constant 0 : i32
    return %arg0, %c0_i32 : i32, i32
  }
  func.func @transform_1(%arg0: i32) -> (i32, i32) {
    %c0_i32 = arith.constant 0 : i32
    %c0_i32_0 = arith.constant 0 : i32
    return %arg0, %c0_i32 : i32, i32
  }
  func.func @transform_2(%arg0: i32) -> (i32, i32, i32) {
    %c0_i32 = arith.constant 0 : i32
    %c0_i32_0 = arith.constant 0 : i32
    %c0_i32_1 = arith.constant 0 : i32
    return %arg0, %c0_i32, %c0_i32_0 : i32, i32, i32
  }
}

</mosaic_0001>

<llo_original>
// kernel: tpu_custom_call.1
$region0: #{tpu_custom_call.1}
  #allocation0 [shape = 'u32[]', space=smem, size = 0x4, offset = 0x4, fixed_abs, tag = 'smem constant byte address 0x4 - core index']
  #allocation1 [shape = 'u32[144,128]{1,0:T(1,128)}', space=vmem, size = 0x12000, scoped, tag = 'internal scratch']
  %s0 = inlined_call_operand.hbm [shape: f32[16,128], index: 0, kind: input, shape index: {}]
  %s1 = inlined_call_operand.hbm [shape: f32[16,128], index: 1, kind: input, shape index: {}]
  %s2 = inlined_call_operand.hbm [shape: f32[1,8,128], index: 2, kind: output, shape index: {}]
  %s3 = sld [smem:[#allocation0]]
  $region26: #{tpu_custom_call.1} parent=0
    _
  %s5 = ssub.s32 1, %s3
  %s6 = scalar_select 0, %s5, %s3
  $region1: #{tpu_custom_call.1} parent=0
    #allocation2 [shape = 'u8[8192]{0}', space=vmem, size = 0x2000, scoped, tag = 'input window, operand 0, single buffered']
    #allocation3 [shape = 's32[1]{0}', space=sflag, size = 0x4, scoped, tag = 'scoped memory for tpu_custom_call.1']
    #allocation4 [shape = 's32[1]{0}', space=sflag, size = 0x4, scoped, tag = 'scoped memory for tpu_custom_call.1']
    #allocation5 [shape = 'u8[8192]{0}', space=vmem, size = 0x2000, scoped, tag = 'input window, operand 1, single buffered']
    #allocation6 [shape = 's32[1]{0}', space=sflag, size = 0x4, scoped, tag = 'scoped memory for tpu_custom_call.1']
    #allocation7 [shape = 'u8[4096]{0}', space=vmem, size = 0x1000, scoped, tag = 'output window, operand 0, single buffered']
    %7 = vsyncpa [#allocation3], 0
    %8 = vsyncpa [#allocation6], 0
    %9 = vsyncpa [#allocation4], 0
    // Predicated region
    $region2: #{tpu_custom_call.1} parent=1 // pred_check
      _
    $region3: #{tpu_custom_call.1} parent=1 // pred_check_branch
      %11 = sbr.rel (0) target = $region5
    $region4: #{tpu_custom_call.1} parent=1 // pred_region
      %s13 = ssub.s32 256, 256
      %14 = vsyncadd [#allocation3], %s13
      %s15 = sshll.u32 [#allocation2], 4
      %s16 = int_to_ptr.vmem [resolvable:$true] %s15
      %21 = dma.hbm_to_vmem [thread:$0]  %s0, 256, %s16, [#allocation3], 128, 128, 8
    $region5: #{tpu_custom_call.1} parent=1 // pred_fallthru
      _
    // Predicated region
    $region6: #{tpu_custom_call.1} parent=1 // pred_check
      _
    $region7: #{tpu_custom_call.1} parent=1 // pred_check_branch
      %23 = sbr.rel (0) target = $region9
    $region8: #{tpu_custom_call.1} parent=1 // pred_region
      %s25 = ssub.s32 256, 256
      %26 = vsyncadd [#allocation6], %s25
      %s27 = sshll.u32 [#allocation5], 4
      %s28 = int_to_ptr.vmem [resolvable:$true] %s27
      %33 = dma.hbm_to_vmem [thread:$0]  %s1, 256, %s28, [#allocation6], 128, 128, 8
    $region9: #{tpu_custom_call.1} parent=1 // pred_fallthru
      _
    // Predicated region
    $region10: #{tpu_custom_call.1} parent=1 // pred_check
      _
    $region11: #{tpu_custom_call.1} parent=1 // pred_check_branch
      %35 = sbr.rel (0) target = $region13
    $region12: #{tpu_custom_call.1} parent=1 // pred_region
      %36 = dma.done [#allocation3], 256
    $region13: #{tpu_custom_call.1} parent=1 // pred_fallthru
      _
    // Predicated region
    $region14: #{tpu_custom_call.1} parent=1 // pred_check
      _
    $region15: #{tpu_custom_call.1} parent=1 // pred_check_branch
      %38 = sbr.rel (0) target = $region17
    $region16: #{tpu_custom_call.1} parent=1 // pred_region
      %39 = dma.done [#allocation6], 256
    $region17: #{tpu_custom_call.1} parent=1 // pred_fallthru
      _
    %v40 = vld [vmem:[#allocation2] sm:$0xff]
    %v41 = vld [vmem:[#allocation2 + $0x8] sm:$0xff]
    %v42 = vld [vmem:[#allocation5] sm:$0xff]
    %v43 = vld [vmem:[#allocation5 + $0x8] sm:$0xff]
    %v44 = vsub.f32 %v40, %v42
    %v45 = vsub.f32 %v41, %v43
    %v46 = vmul.f32 %v44, %v44
    %v47 = vmul.f32 %v45, %v45
    %v48 = vadd.f32 %v46, %v47
    %49 = vst [vmem:[#allocation7] sm:$0xff] %v48
    // Predicated region
    $region18: #{tpu_custom_call.1} parent=1 // pred_check
      _
    $region19: #{tpu_custom_call.1} parent=1 // pred_check_branch
      %51 = sbr.rel (0) target = $region21
    $region20: #{tpu_custom_call.1} parent=1 // pred_region
      %s53 = ssub.s32 128, 128
      %54 = vsyncadd [#allocation4], %s53
      %s56 = sshll.u32 [#allocation7], 4
      %s57 = int_to_ptr.vmem [resolvable:$true] %s56
      %59 = dma.vmem_to_hbm [thread:$0]  %s57, 128, %s2, [#allocation4]
    $region21: #{tpu_custom_call.1} parent=1 // pred_fallthru
      _
    // Predicated region
    $region22: #{tpu_custom_call.1} parent=1 // pred_check
      _
    $region23: #{tpu_custom_call.1} parent=1 // pred_check_branch
      %61 = sbr.rel (0) target = $region25
    $region24: #{tpu_custom_call.1} parent=1 // pred_region
      %62 = dma.done [#allocation4], 128
    $region25: #{tpu_custom_call.1} parent=1 // pred_fallthru
      _
    %63 = vsyncpa [#allocation3], 1
    %64 = vsyncpa [#allocation6], 1
    %65 = vsyncpa [#allocation4], 1

</llo_original>
